<compile_context>
chip_gen: v6e
topology: v6e:2x2x1
jax: 0.10.0
libtpu: 0.0.40
codegen_flags: <defaults>
</compile_context>

<pallas_src>
import functools

import jax
import jax.numpy as jnp
from jax import lax
from jax.experimental import pallas as pl
from jax.experimental.pallas import tpu as pltpu


def _round_up(x, m):
    return ((x + m - 1) // m) * m


def _vmem_budget():
    """(per-step working-set budget, scoped-vmem limit) per TPU generation."""
    kind = ""
    try:
        kind = jax.devices()[0].device_kind.lower()
    except Exception:  # pragma: no cover - defensive
        pass
    if any(t in kind for t in ("v4", "v5", "v6")):
        return 72 << 20, 100 << 20        # 128 MiB physical VMEM
    return 32 << 20, 48 << 20             # v7x / unknown: 64 MiB physical VMEM


def _pick_tile(dim, candidates, align=1):
    """Largest candidate dividing `dim`; else largest aligned divisor <= max(cand)."""
    for c in candidates:
        if c <= dim and dim % c == 0:
            return c
    cap = max(candidates)
    best = None
    d = 1
    while d * d <= dim:
        if dim % d == 0:
            for q in (d, dim // d):
                if q <= cap and q % align == 0 and (best is None or q > best):
                    best = q
        d += 1
    return best if best is not None else dim


# --------------------------------------------------------------------------
# kernel 1: pixel normalizer  out = (x - mean) * inv_std   (per-channel)
# --------------------------------------------------------------------------
def _normalize_kernel(x_ref, mean_ref, inv_std_ref, o_ref):
    o_ref[...] = ((x_ref[...] - mean_ref[...]) * inv_std_ref[...]).astype(o_ref.dtype)


def normalize_images(images, pixel_mean, pixel_std, out_dtype=jnp.float32):
    """images: (N, C, H, W) -> (N, C, H, W), (x - mean) / std per channel."""
    n, c, h, w = images.shape
    rows, lanes = n * c, h * w
    x = images.reshape(rows, lanes).astype(jnp.float32)
    mean = jnp.tile(pixel_mean.reshape(-1).astype(jnp.float32), n).reshape(rows, 1)
    inv_std = jnp.tile((1.0 / pixel_std.reshape(-1)).astype(jnp.float32), n).reshape(rows, 1)

    # HBM-bandwidth bound: use big lane-dense blocks (~0.5-2 MiB per block).
    lane_tile = _pick_tile(
        lanes, (32768, 16384, 8192, 4096, 2048, 1024, 512, 256, 128), align=128)
    row_cap = max(8, (2 << 20) // max(1, lane_tile * 4))
    row_cands = tuple(r for r in (128, 64, 32, 24, 16, 8) if r <= row_cap) or (8,)
    row_tile = rows if rows < 8 else _pick_tile(rows, row_cands, align=8)
    grid = (rows // row_tile, lanes // lane_tile)

    out = pl.pallas_call(
        _normalize_kernel,
        out_shape=jax.ShapeDtypeStruct((rows, lanes), out_dtype),
        grid=grid,
        in_specs=[
            pl.BlockSpec((row_tile, lane_tile), lambda i, j: (i, j)),
            pl.BlockSpec((row_tile, 1), lambda i, j: (i, 0)),
            pl.BlockSpec((row_tile, 1), lambda i, j: (i, 0)),
        ],
        out_specs=pl.BlockSpec((row_tile, lane_tile), lambda i, j: (i, j)),
        compiler_params=pltpu.CompilerParams(
            dimension_semantics=("parallel", "parallel"),
            vmem_limit_bytes=32 << 20),
    )(x, mean, inv_std)
    return out.reshape(n, c, h, w)


# --------------------------------------------------------------------------
# kernel 2: controller conv (3x3, stride 1, pad 1)
# Row-tiled with halo; single K=9*Cin MXU matmul per tile from an in-VMEM
# im2col built out of contiguous slices of the flattened padded feature map.
# --------------------------------------------------------------------------
def _conv3x3_kernel(x_ref, w_ref, b_ref, o_ref, *, tile_h, w, wp, cin):
    # x_ref: (1, Lw, Cin) bf16 — (tile_h+2) padded rows, spatial dims flattened
    #        so each of the 9 taps is a *contiguous* row-slice (no strided copy).
    # w_ref: (9*Cin, Cout_pad) bf16 (tap-major); b_ref: (1, Cout_pad) f32
    # o_ref: (1, tile_h*W, Cout_pad) f32 — lane-dense output slab.
    span = tile_h * wp
    xf = x_ref[0]
    cols = []
    for ky in range(3):
        for kx in range(3):
            start = ky * wp + kx
            cols.append(xf[start:start + span, :])
    xcol = jnp.concatenate(cols, axis=1)                  # in-VMEM im2col, K=9*Cin
    acc = jnp.dot(xcol, w_ref[...], preferred_element_type=jnp.float32)
    acc = acc + b_ref[...]
    cout_pad = acc.shape[-1]
    # drop the 2 wrap-around columns (computed on padded width Wp, kept only W)
    acc = acc.reshape(tile_h, wp, cout_pad)[:, :w, :].reshape(tile_h * w, cout_pad)
    o_ref[0] = acc


def _conv_vmem_bytes(tile_h, w, cin, cout_pad):
    wp = w + 2
    lw = _round_up((tile_h + 2) * wp + 2, 8)
    in_blk = lw * cin * 2
    w_blk = 9 * cin * cout_pad * 2
    out_blk = tile_h * w * cout_pad * 4
    xcol = tile_h * wp * 9 * cin * 2
    acc = tile_h * wp * cout_pad * 4
    return 2 * (in_blk + w_blk + out_blk) + xcol + acc + (2 << 20)


def _conv_tile_h(h, w, cin, cout_pad, budget):
    wp = w + 2
    divs = sorted((d for d in range(1, h + 1) if h % d == 0), reverse=True)
    ok = [d for d in divs
          if d < h and d <= 64 and (d * w) % 8 == 0 and (d * wp) % 8 == 0]
    for d in ok:
        if _conv_vmem_bytes(d, w, cin, cout_pad) <= budget:
            return d
    return ok[-1] if ok else h


def controller_conv(x, weight, bias):
    """x: (N, Cin, H, W); weight: (Cout, Cin, 3, 3); bias: (Cout,).

    Returns a lane-dense (N, H*W, Cout_pad) f32 tensor with Cout padded up to a
    multiple of 128 (169 -> 256); downstream mask-head consumers slice [..., :Cout].
    """
    n, cin, h, w = x.shape
    cout = weight.shape[0]
    cout_pad = _round_up(max(cout, 128), 128)
    wp = w + 2
    budget, limit = _vmem_budget()

    # weight -> (9*Cin, Cout_pad): tap-major (ky, kx) to match the im2col order.
    wt = jnp.transpose(weight, (2, 3, 1, 0)).reshape(9 * cin, cout)
    wt = jnp.pad(wt, ((0, 0), (0, cout_pad - cout))).astype(jnp.bfloat16)
    bp = jnp.pad(bias, (0, cout_pad - cout)).reshape(1, cout_pad).astype(jnp.float32)

    # Single padded NHWC copy; spatial dims flattened (no HBM im2col blow-up).
    x_nhwc = jnp.transpose(x, (0, 2, 3, 1))
    xpad = jnp.pad(x_nhwc, ((0, 0), (1, 1), (1, 1), (0, 0)))      # (N, H+2, Wp, Cin)
    xflat0 = xpad.reshape(n, (h + 2) * wp, cin).astype(jnp.bfloat16)

    def run(tile_h):
        t = h // tile_h
        lw = _round_up((tile_h + 2) * wp + 2, 8)
        flat_len = (t - 1) * tile_h * wp + lw
        xflat = jnp.pad(xflat0, ((0, 0), (0, flat_len - (h + 2) * wp), (0, 0)))
        if t > 1:
            # 2-row halo via element offsets into the padded/flattened input.
            x_spec = pl.BlockSpec((1, pl.Element(lw), cin),
                                  lambda i, j: (i, j * tile_h * wp, 0))
        else:
            x_spec = pl.BlockSpec((1, lw, cin), lambda i, j: (i, 0, 0))
        kern = functools.partial(_conv3x3_kernel, tile_h=tile_h, w=w, wp=wp, cin=cin)
        out = pl.pallas_call(
            kern,
            out_shape=jax.ShapeDtypeStruct((n, h * w, cout_pad), jnp.float32),
            grid=(n, t),
            in_specs=[
                x_spec,
                pl.BlockSpec((9 * cin, cout_pad), lambda i, j: (0, 0)),
                pl.BlockSpec((1, cout_pad), lambda i, j: (0, 0)),
            ],
            out_specs=pl.BlockSpec((1, tile_h * w, cout_pad), lambda i, j: (i, j, 0)),
            compiler_params=pltpu.CompilerParams(
                dimension_semantics=("parallel", "parallel"),
                vmem_limit_bytes=limit),
        )(xflat, wt, bp)
        return jax.block_until_ready(out)

    tile_h = _conv_tile_h(h, w, cin, cout_pad, budget)
    if tile_h == h:
        return run(h)
    try:
        return run(tile_h)
    except Exception:
        # Untiled per-image fallback if halo (pl.Element) indexing is unavailable.
        return run(h)


# --------------------------------------------------------------------------
# kernel 3: get_images_color_similarity, batched over N and row-tiled
# (unfold_wo_center + channel-norm + exp + zero-padded-mask weighting)
# --------------------------------------------------------------------------
def _color_sim_kernel(img_ref, msk_ref, o_ref, *, tile_h, w, ks, dil, pad):
    # img_ref: (1, C, Bh, Wp) zero-padded; msk_ref: (1, Bh, Wp); Bh >= tile_h+2*pad
    # o_ref  : (1, K*K-1, tile_h*W) — lane-dense output slab.
    img = img_ref[0]
    msk = msk_ref[0]
    center = img[:, pad:pad + tile_h, pad:pad + w]
    outs = []
    for ky in range(ks):
        for kx in range(ks):
            if ky == ks // 2 and kx == ks // 2:
                continue
            nb = img[:, ky * dil:ky * dil + tile_h, kx * dil:kx * dil + w]
            d = center - nb
            ssq = jnp.sum(d * d, axis=0)                  # ||diff||^2 over channels
            sim = jnp.exp(-0.5 * jnp.sqrt(ssq))
            wgt = msk[ky * dil:ky * dil + tile_h, kx * dil:kx * dil + w]
            outs.append(sim * wgt)
    o_ref[0] = jnp.stack(outs, axis=0).reshape(len(outs), tile_h * w).astype(o_ref.dtype)


def images_color_similarity(images, image_masks, kernel_size, dilation):
    """Batched get_images_color_similarity: (N,C,H,W),(N,H,W) -> (N,K*K-1,H,W)."""
    assert kernel_size % 2 == 1
    n, c, h, w = images.shape
    pad = (kernel_size + (dilation - 1) * (kernel_size - 1)) // 2
    nnb = kernel_size * kernel_size - 1
    wp = w + 2 * pad
    _, limit = _vmem_budget()

    def run(tile_h):
        t = h // tile_h
        block_h = _round_up(tile_h + 2 * pad, 8) if t > 1 else h + 2 * pad
        rows_hbm = (t - 1) * tile_h + block_h
        img_p = jnp.pad(images.astype(jnp.float32),
                        ((0, 0), (0, 0), (pad, rows_hbm - h - pad), (pad, pad)))
        msk_p = jnp.pad(image_masks.astype(jnp.float32),
                        ((0, 0), (pad, rows_hbm - h - pad), (pad, pad)))
        if t > 1:
            img_spec = pl.BlockSpec((1, c, pl.Element(block_h), wp),
                                    lambda i, j: (i, 0, j * tile_h, 0))
            msk_spec = pl.BlockSpec((1, pl.Element(block_h), wp),
                                    lambda i, j: (i, j * tile_h, 0))
        else:
            img_spec = pl.BlockSpec((1, c, block_h, wp), lambda i, j: (i, 0, 0, 0))
            msk_spec = pl.BlockSpec((1, block_h, wp), lambda i, j: (i, 0, 0))
        kern = functools.partial(_color_sim_kernel, tile_h=tile_h, w=w,
                                 ks=kernel_size, dil=dilation, pad=pad)
        out = pl.pallas_call(
            kern,
            out_shape=jax.ShapeDtypeStruct((n, nnb, h * w), jnp.float32),
            grid=(n, t),
            in_specs=[img_spec, msk_spec],
            out_specs=pl.BlockSpec((1, nnb, tile_h * w), lambda i, j: (i, 0, j)),
            compiler_params=pltpu.CompilerParams(
                dimension_semantics=("parallel", "parallel"),
                vmem_limit_bytes=min(limit, 32 << 20)),
        )(img_p, msk_p)
        return jax.block_until_ready(out)

    tile_h = h
    for th in (64, 32, 16, 8):
        if th < h and h % th == 0 and (th * w) % 128 == 0:
            tile_h = th
            break
    if tile_h == h:
        out = run(h)
    else:
        try:
            out = run(tile_h)
        except Exception:
            out = run(h)       # untiled fallback if halo indexing is unavailable
    return out.reshape(n, nnb, h, w)


# --------------------------------------------------------------------------
if __name__ == "__main__":
    key = jax.random.PRNGKey(0)
    k_img, k_feat, k_w, k_b = jax.random.split(key, 4)

    # Synthetic "batched_inputs": batch of 2 RGB images, 32x32 (NCHW like PyTorch).
    N, H, W = 2, 32, 32
    original_images = jnp.clip(
        127.5 + 2.0 * jax.random.normal(k_img, (N, 3, H, W), jnp.float32), 0.0, 255.0)

    # ---- pixel normalizer ----
    pixel_mean = jnp.array([103.53, 116.28, 123.675], jnp.float32)
    pixel_std = jnp.array([57.375, 57.12, 58.395], jnp.float32)
    images_norm = normalize_images(original_images, pixel_mean, pixel_std)
    ref_norm = (original_images - pixel_mean.reshape(1, 3, 1, 1)) / pixel_std.reshape(1, 3, 1, 1)
    assert images_norm.shape == (N, 3, H, W)
    assert bool(jnp.allclose(images_norm, ref_norm, atol=1e-3, rtol=1e-4))

    # TODO(synk): backbone / proposal_generator / mask_branch / mask_head are
    # external detectron2 registry components; stand in with a synthetic P3 map.
    Cin, Hf, Wf = 32, 16, 16
    features_p3 = jax.random.normal(k_feat, (N, Cin, Hf, Wf), jnp.float32)

    # ---- controller: 3x3 conv predicting dynamic mask-head params ----
    num_gen_params = 169  # CondInst dynamic mask head: 8 channels, 3 layers, rel-coords
    ctrl_w = 0.01 * jax.random.normal(k_w, (num_gen_params, Cin, 3, 3), jnp.float32)
    ctrl_b = 0.05 * jax.random.normal(k_b, (num_gen_params,), jnp.float32)
    ctrl_out = controller_conv(features_p3, ctrl_w, ctrl_b)     # (N, Hf*Wf, 256)
    assert ctrl_out.shape == (N, Hf * Wf, 256)
    ref_conv = lax.conv_general_dilated(
        features_p3, ctrl_w, window_strides=(1, 1), padding="SAME",
        dimension_numbers=("NCHW", "OIHW", "NCHW")) + ctrl_b.reshape(1, -1, 1, 1)
    got_conv = jnp.transpose(
        ctrl_out[:, :, :num_gen_params].reshape(N, Hf, Wf, num_gen_params), (0, 3, 1, 2))
    assert bool(jnp.allclose(got_conv, ref_conv, atol=2e-2, rtol=2e-2))

    # ---- BoxInst branch of add_bitmasks_from_boxes ----
    mask_out_stride = 2
    start = mask_out_stride // 2
    # avg_pool2d(kernel=stride=mask_out_stride) + RGB->BGR flip (glue reshapes)
    ds = original_images.reshape(N, 3, H // 2, 2, W // 2, 2).mean(axis=(3, 5))
    ds = ds[:, ::-1, :, :]
    # TODO(synk): skimage.color.rgb2lab is a host-side numpy op with no Pallas
    # equivalent; the pairwise similarity consumes the BGR-downsampled images directly.
    image_masks = jnp.ones((N, H, W), jnp.float32)
    image_masks_ds = image_masks[:, start::mask_out_stride, start::mask_out_stride]

    pairwise_size, pairwise_dilation = 3, 2
    sims = images_color_similarity(ds, image_masks_ds, pairwise_size, pairwise_dilation)
    assert sims.shape == (N, pairwise_size ** 2 - 1, H // 2, W // 2)

    # pure-JAX reference of unfold_wo_center + torch.norm + exp + mask weighting
    def ref_color_sim(imgs, msks, k, d):
        p = (k + (d - 1) * (k - 1)) // 2
        _, _, hh, ww = imgs.shape
        ip = jnp.pad(imgs, ((0, 0), (0, 0), (p, p), (p, p)))
        mp = jnp.pad(msks, ((0, 0), (p, p), (p, p)))
        res = []
        for ky in range(k):
            for kx in range(k):
                if ky == k // 2 and kx == k // 2:
                    continue
                nb = ip[:, :, ky * d:ky * d + hh, kx * d:kx * d + ww]
                diff = imgs - nb
                sim = jnp.exp(-0.5 * jnp.sqrt(jnp.sum(diff * diff, axis=1)))
                wgt = mp[:, ky * d:ky * d + hh, kx * d:kx * d + ww]
                res.append(sim * wgt)
        return jnp.stack(res, axis=1)

    ref_sims = ref_color_sim(ds, image_masks_ds, pairwise_size, pairwise_dilation)
    assert bool(jnp.allclose(sims, ref_sims, atol=1e-4, rtol=1e-4))

    jax.block_until_ready((images_norm, ctrl_out, sims))
    print("KERNEL_OK")
</pallas_src>

<mosaic_0001>
module attributes {stable_mosaic.version = 11 : i64} {
  func.func @_normalize_kernel(%arg0: i32, %arg1: i32, %arg2: memref<6x1024xf32, #tpu.memory_space<vmem>>, %arg3: memref<6x1xf32, #tpu.memory_space<vmem>>, %arg4: memref<6x1xf32, #tpu.memory_space<vmem>>, %arg5: memref<6x1024xf32, #tpu.memory_space<vmem>>) attributes {dimension_semantics = [#tpu.dimension_semantics<parallel>, #tpu.dimension_semantics<parallel>], iteration_bounds = array<i64: 1, 1>, scalar_prefetch = 0 : i64, scratch_operands = 0 : i64, tpu.core_type = #tpu.core_type<tc>, window_params = [{transform_indices = @transform_0, window_bounds = array<i64: 6, 1024>}, {transform_indices = @transform_1, window_bounds = array<i64: 6, 1>}, {transform_indices = @transform_2, window_bounds = array<i64: 6, 1>}, {transform_indices = @transform_3, window_bounds = array<i64: 6, 1024>}]} {
    %c0 = arith.constant 0 : index
    %c0_0 = arith.constant 0 : index
    %0 = vector.load %arg2[%c0, %c0_0] : memref<6x1024xf32, #tpu.memory_space<vmem>>, vector<6x1024xf32>
    %c0_1 = arith.constant 0 : index
    %c0_2 = arith.constant 0 : index
    %1 = vector.load %arg3[%c0_1, %c0_2] : memref<6x1xf32, #tpu.memory_space<vmem>>, vector<6x1xf32>
    %2 = vector.broadcast %1 : vector<6x1xf32> to vector<6x1024xf32>
    %3 = arith.subf %0, %2 : vector<6x1024xf32>
    %c0_3 = arith.constant 0 : index
    %c0_4 = arith.constant 0 : index
    %4 = vector.load %arg4[%c0_3, %c0_4] : memref<6x1xf32, #tpu.memory_space<vmem>>, vector<6x1xf32>
    %5 = vector.broadcast %4 : vector<6x1xf32> to vector<6x1024xf32>
    %6 = arith.mulf %3, %5 : vector<6x1024xf32>
    %c0_5 = arith.constant 0 : index
    %c0_6 = arith.constant 0 : index
    %7 = vector.load %arg5[%c0_5, %c0_6] : memref<6x1024xf32, #tpu.memory_space<vmem>>, vector<6x1024xf32>
    tpu.vector_store %arg5[%c0_5, %c0_6], %6 {strides = array<i32>} : memref<6x1024xf32, #tpu.memory_space<vmem>>, vector<6x1024xf32>,
    return
  }
  func.func @transform_0(%arg0: i32, %arg1: i32) -> (i32, i32) {
    %c0_i32 = arith.constant 0 : i32
    return %arg0, %arg1 : i32, i32
  }
  func.func @transform_1(%arg0: i32, %arg1: i32) -> (i32, i32) {
    %c0_i32 = arith.constant 0 : i32
    %c0_i32_0 = arith.constant 0 : i32
    return %arg0, %c0_i32 : i32, i32
  }
  func.func @transform_2(%arg0: i32, %arg1: i32) -> (i32, i32) {
    %c0_i32 = arith.constant 0 : i32
    %c0_i32_0 = arith.constant 0 : i32
    return %arg0, %c0_i32 : i32, i32
  }
  func.func @transform_3(%arg0: i32, %arg1: i32) -> (i32, i32) {
    %c0_i32 = arith.constant 0 : i32
    return %arg0, %arg1 : i32, i32
  }
}

</mosaic_0001>

<llo_original>
// kernel: tpu_custom_call.1
$region0: #{tpu_custom_call.1}
  #allocation0 [shape = 'u32[]', space=smem, size = 0x4, offset = 0x4, fixed_abs, tag = 'smem constant byte address 0x4 - core index']
  #allocation1 [shape = 'u32[144,128]{1,0:T(1,128)}', space=vmem, size = 0x12000, scoped, tag = 'internal scratch']
  %s0 = inlined_call_operand.hbm [shape: f32[6,1024], index: 0, kind: input, shape index: {}]
  %s1 = inlined_call_operand.vmem [shape: f32[6,1], index: 1, kind: input, shape index: {}]
  %s2 = inlined_call_operand.vmem [shape: f32[6,1], index: 2, kind: input, shape index: {}]
  %s3 = inlined_call_operand.hbm [shape: f32[6,1024], index: 3, kind: output, shape index: {}]
  %s4 = sld [smem:[#allocation0]]
  $region26: #{tpu_custom_call.1} parent=0
    _
  %s6 = ssub.s32 1, %s4
  %s7 = scalar_select 0, %s6, %s4
  $region1: #{tpu_custom_call.1} parent=0
    #allocation2 [shape = 'u8[32768]{0}', space=vmem, size = 0x8000, scoped, tag = 'input window, operand 0, single buffered']
    #allocation3 [shape = 's32[1]{0}', space=sflag, size = 0x4, scoped, tag = 'scoped memory for tpu_custom_call.1']
    #allocation4 [shape = 's32[1]{0}', space=sflag, size = 0x4, scoped, tag = 'scoped memory for tpu_custom_call.1']
    #allocation5 [shape = 'u8[32768]{0}', space=vmem, size = 0x8000, scoped, tag = 'output window, operand 0, single buffered']
    %8 = vsyncpa [#allocation3], 0
    %9 = vsyncpa [#allocation4], 0
    // Predicated region
    $region2: #{tpu_custom_call.1} parent=1 // pred_check
      _
    $region3: #{tpu_custom_call.1} parent=1 // pred_check_branch
      %11 = sbr.rel (0) target = $region5
    $region4: #{tpu_custom_call.1} parent=1 // pred_region
      %s13 = ssub.s32 1024, 1024
      %14 = vsyncadd [#allocation3], %s13
      %s16 = sshll.u32 [#allocation2], 4
      %s17 = int_to_ptr.vmem [resolvable:$true] %s16
      %19 = dma.hbm_to_vmem [thread:$0]  %s0, 1024, %s17, [#allocation3]
    $region5: #{tpu_custom_call.1} parent=1 // pred_fallthru
      _
    // Predicated region
    $region6: #{tpu_custom_call.1} parent=1 // pred_check
      _
    $region7: #{tpu_custom_call.1} parent=1 // pred_check_branch
      %21 = sbr.rel (0) target = $region9
    $region8: #{tpu_custom_call.1} parent=1 // pred_region
      _
    $region9: #{tpu_custom_call.1} parent=1 // pred_fallthru
      _
    // Predicated region
    $region10: #{tpu_custom_call.1} parent=1 // pred_check
      _
    $region11: #{tpu_custom_call.1} parent=1 // pred_check_branch
      %23 = sbr.rel (0) target = $region13
    $region12: #{tpu_custom_call.1} parent=1 // pred_region
      _
    $region13: #{tpu_custom_call.1} parent=1 // pred_fallthru
      _
    // Predicated region
    $region14: #{tpu_custom_call.1} parent=1 // pred_check
      _
    $region15: #{tpu_custom_call.1} parent=1 // pred_check_branch
      %25 = sbr.rel (0) target = $region17
    $region16: #{tpu_custom_call.1} parent=1 // pred_region
      %26 = dma.done [#allocation3], 1024
    $region17: #{tpu_custom_call.1} parent=1 // pred_fallthru
      _
    %v27 = vld [vmem:[#allocation2] sm:$0x3f]
    %v28 = vld [vmem:[#allocation2 + $0x8] sm:$0x3f]
    %v29 = vld [vmem:[#allocation2 + $0x10] sm:$0x3f]
    %v30 = vld [vmem:[#allocation2 + $0x18] sm:$0x3f]
    %v31 = vld [vmem:[#allocation2 + $0x20] sm:$0x3f]
    %v32 = vld [vmem:[#allocation2 + $0x28] sm:$0x3f]
    %v33 = vld [vmem:[#allocation2 + $0x30] sm:$0x3f]
    %v34 = vld [vmem:[#allocation2 + $0x38] sm:$0x3f]
    %v35 = vld [vmem:[%s1] sm:$0x3f]
    %37 = vset.pattern.permute.xlu0 0
    %38 = vperm.xlu0 %37, %v35
    %v39 = vpop.permute.xlu0 %38
    %v41 = vsub.f32 %v27, %v39
    %v42 = vsub.f32 %v28, %v39
    %v43 = vsub.f32 %v29, %v39
    %v44 = vsub.f32 %v30, %v39
    %v45 = vsub.f32 %v31, %v39
    %v46 = vsub.f32 %v32, %v39
    %v47 = vsub.f32 %v33, %v39
    %v48 = vsub.f32 %v34, %v39
    %v49 = vld [vmem:[%s2] sm:$0x3f]
    %51 = vset.pattern.permute.xlu0 0
    %52 = vperm.xlu0 %51, %v49
    %v53 = vpop.permute.xlu0 %52
    %v55 = vmul.f32 %v41, %v53
    %v56 = vmul.f32 %v42, %v53
    %v57 = vmul.f32 %v43, %v53
    %v58 = vmul.f32 %v44, %v53
    %v59 = vmul.f32 %v45, %v53
    %v60 = vmul.f32 %v46, %v53
    %v61 = vmul.f32 %v47, %v53
    %v62 = vmul.f32 %v48, %v53
    %63 = vst [vmem:[#allocation5] sm:$0x3f] %v55
    %64 = vst [vmem:[#allocation5 + $0x8] sm:$0x3f] %v56
    %65 = vst [vmem:[#allocation5 + $0x10] sm:$0x3f] %v57
    %66 = vst [vmem:[#allocation5 + $0x18] sm:$0x3f] %v58
    %67 = vst [vmem:[#allocation5 + $0x20] sm:$0x3f] %v59
    %68 = vst [vmem:[#allocation5 + $0x28] sm:$0x3f] %v60
    %69 = vst [vmem:[#allocation5 + $0x30] sm:$0x3f] %v61
    %70 = vst [vmem:[#allocation5 + $0x38] sm:$0x3f] %v62
    // Predicated region
    $region18: #{tpu_custom_call.1} parent=1 // pred_check
      _
    $region19: #{tpu_custom_call.1} parent=1 // pred_check_branch
      %72 = sbr.rel (0) target = $region21
    $region20: #{tpu_custom_call.1} parent=1 // pred_region
      %s74 = ssub.s32 1024, 1024
      %75 = vsyncadd [#allocation4], %s74
      %s77 = sshll.u32 [#allocation5], 4
      %s78 = int_to_ptr.vmem [resolvable:$true] %s77
      %80 = dma.vmem_to_hbm [thread:$0]  %s78, 1024, %s3, [#allocation4]
    $region21: #{tpu_custom_call.1} parent=1 // pred_fallthru
      _
    // Predicated region
    $region22: #{tpu_custom_call.1} parent=1 // pred_check
      _
    $region23: #{tpu_custom_call.1} parent=1 // pred_check_branch
      %82 = sbr.rel (0) target = $region25
    $region24: #{tpu_custom_call.1} parent=1 // pred_region
      %83 = dma.done [#allocation4], 1024
    $region25: #{tpu_custom_call.1} parent=1 // pred_fallthru
      _
    %84 = vsyncpa [#allocation3], 1
    %85 = vsyncpa [#allocation4], 1

</llo_original>
